<compile_context>
chip_gen: v5e
topology: v5e:2x2
jax: 0.10.0
libtpu: 0.0.40
codegen_flags: <defaults>
</compile_context>

<pallas_src>
import functools

import jax
import jax.numpy as jnp
import numpy as np
from jax.experimental import pallas as pl
from jax.experimental.pallas import tpu as pltpu

PAD = 8          # every feature dim (input, 6, 6, 4, output) fits in one 8-sublane tile
N_LAYERS = 4
LANE = 128       # TPU lane width; batch tiles are multiples of this
MAX_TILE = 4096  # lanes per grid step: [8, 4096] f32 block = 128 KiB
MIN_SPLIT = 512  # once the batch has >= 512 lanes, use >= 2 grid steps (v7x 2nd TC)


def _mlp_kernel(x_ref, w_ref, b_ref, o_ref):
    # Feature-major / batch-on-lanes layout:
    #   x_ref: [8, tile_n]    w_ref: [4, 8, 8]  (each slice is W_i^T, zero padded)
    #   b_ref: [4, 8, 1]      o_ref: [8, tile_n]
    w = w_ref[...]          # 1 KiB of weights resident in vregs
    b = b_ref[...]          # [4, 8, 1]; b[i] broadcasts along lanes
    h = x_ref[...]          # [8, tile_n] f32, lane-dense

    h = jnp.maximum(jnp.dot(w[0], h, preferred_element_type=jnp.float32) + b[0], 0.0)
    h = jnp.maximum(jnp.dot(w[1], h, preferred_element_type=jnp.float32) + b[1], 0.0)
    h = jnp.maximum(jnp.dot(w[2], h, preferred_element_type=jnp.float32) + b[2], 0.0)
    o_ref[...] = jnp.dot(w[3], h, preferred_element_type=jnp.float32) + b[3]


def pack_params(params):
    """One-time packing (off the hot path): pad each layer's transposed weight
    W_i^T [out,in] into a [4,8,8] slab and bias into [4,8,1].  Zero padding is
    exact through relu."""
    W = np.zeros((N_LAYERS, PAD, PAD), np.float32)
    B = np.zeros((N_LAYERS, PAD, 1), np.float32)
    for i in range(N_LAYERS):
        w = np.asarray(params[f"w{i + 1}"], np.float32)   # [in, out]
        bb = np.asarray(params[f"b{i + 1}"], np.float32)  # [out]
        assert w.shape[0] <= PAD and w.shape[1] <= PAD, "feature dim exceeds PAD=8"
        assert bb.shape[0] <= PAD, "bias dim exceeds PAD=8"
        W[i, : w.shape[1], : w.shape[0]] = w.T            # store transposed
        B[i, : bb.shape[0], 0] = bb
    return jnp.asarray(W), jnp.asarray(B)


def _pick_tile(n_lanes):
    """Pick a lane tile (multiple of 128).  Small batches: one step.  Larger
    batches: big balanced tiles capped at MAX_TILE, always >= 2 steps so the
    second TensorCore on v7x has work (harmless no-op on v5e/v6e)."""
    if n_lanes < MIN_SPLIT:
        return n_lanes
    n_tiles = max(2, -(-n_lanes // MAX_TILE))
    return -(-(n_lanes // LANE) // n_tiles) * LANE


@functools.partial(jax.jit, static_argnames=("out_size",))
def mlp_forward(x, w_packed, b_packed, *, out_size):
    """x: [N, input_size] f32.  w_packed: [4,8,8], b_packed: [4,8,1]."""
    N, D = x.shape
    assert D <= PAD and out_size <= PAD, "feature dims must fit in PAD=8"

    n128 = -(-N // LANE) * LANE
    tile = _pick_tile(n128)
    n_pad = -(-N // tile) * tile

    # Feature-major, lane-dense padded input: [8, n_pad] in a single pad pass.
    x_pad = jnp.pad(x.T, ((0, PAD - D), (0, n_pad - N)))

    out_pad = pl.pallas_call(
        _mlp_kernel,
        out_shape=jax.ShapeDtypeStruct((PAD, n_pad), jnp.float32),
        grid=(n_pad // tile,),
        in_specs=[
            pl.BlockSpec((PAD, tile), lambda i: (0, i)),              # x: lane-tiled batch
            pl.BlockSpec((N_LAYERS, PAD, PAD), lambda i: (0, 0, 0)),  # W^T slab (resident)
            pl.BlockSpec((N_LAYERS, PAD, 1), lambda i: (0, 0, 0)),    # bias slab (resident)
        ],
        out_specs=pl.BlockSpec((PAD, tile), lambda i: (0, i)),
        compiler_params=pltpu.CompilerParams(
            dimension_semantics=("parallel",)),
    )(x_pad, w_packed, b_packed)

    # Tiny [out_size, N] slice -> [N, out_size] in the wrapper.
    return out_pad[:out_size, :N].T


def init_params(key, input_size, output_size):
    """Deterministic init mirroring nn.Linear shapes (weights stored [in, out])."""
    sizes = [(input_size, 6), (6, 6), (6, 4), (4, output_size)]
    params = {}
    for i, (fan_in, fan_out) in enumerate(sizes, start=1):
        key, kw, kb = jax.random.split(key, 3)
        bound = 1.0 / np.sqrt(fan_in)
        params[f"w{i}"] = jax.random.uniform(
            kw, (fan_in, fan_out), jnp.float32, -bound, bound)
        params[f"b{i}"] = jax.random.uniform(
            kb, (fan_out,), jnp.float32, -bound, bound)
    return params


def reference_forward(x, params):
    h = jnp.maximum(x @ params["w1"] + params["b1"], 0.0)
    h = jnp.maximum(h @ params["w2"] + params["b2"], 0.0)
    h = jnp.maximum(h @ params["w3"] + params["b3"], 0.0)
    return h @ params["w4"] + params["b4"]


if __name__ == "__main__":
    input_size, output_size = 4, 3   # iris: 4 features, 3 classes
    batch = 8

    key = jax.random.PRNGKey(0)
    kx, kp = jax.random.split(key)
    x = jax.random.normal(kx, (batch, input_size), jnp.float32)
    params = init_params(kp, input_size, output_size)

    # One-time packing of params -- off the per-call hot path.
    w_packed, b_packed = pack_params(params)

    out = mlp_forward(x, w_packed, b_packed, out_size=output_size)
    out = jax.block_until_ready(out)
    ref = reference_forward(x, params)
    assert out.shape == (batch, output_size)
    assert np.allclose(np.asarray(out), np.asarray(ref), atol=1e-5), "mismatch vs reference"

    # Larger batch to exercise the multi-tile (>=2 parallel grid steps) path.
    xb = jax.random.normal(kx, (1000, input_size), jnp.float32)
    outb = jax.block_until_ready(
        mlp_forward(xb, w_packed, b_packed, out_size=output_size))
    refb = reference_forward(xb, params)
    assert outb.shape == (1000, output_size)
    assert np.allclose(np.asarray(outb), np.asarray(refb), atol=1e-5), "mismatch (batched)"

    print("KERNEL_OK")
</pallas_src>

<mosaic_0001>
module attributes {stable_mosaic.version = 11 : i64} {
  func.func @_mlp_kernel(%arg0: i32, %arg1: memref<8x128xf32, #tpu.memory_space<vmem>>, %arg2: memref<4x8x8xf32, #tpu.memory_space<vmem>>, %arg3: memref<4x8x1xf32, #tpu.memory_space<vmem>>, %arg4: memref<8x128xf32, #tpu.memory_space<vmem>>) attributes {dimension_semantics = [#tpu.dimension_semantics<parallel>], iteration_bounds = array<i64: 1>, scalar_prefetch = 0 : i64, scratch_operands = 0 : i64, tpu.core_type = #tpu.core_type<tc>, window_params = [{transform_indices = @transform_0, window_bounds = array<i64: 8, 128>}, {pipeline_mode = #tpu.pipeline_mode<synchronous>, transform_indices = @transform_1, window_bounds = array<i64: 4, 8, 8>}, {pipeline_mode = #tpu.pipeline_mode<synchronous>, transform_indices = @transform_2, window_bounds = array<i64: 4, 8, 1>}, {transform_indices = @transform_3, window_bounds = array<i64: 8, 128>}]} {
    %c0 = arith.constant 0 : index
    %c0_0 = arith.constant 0 : index
    %c0_1 = arith.constant 0 : index
    %0 = vector.load %arg2[%c0, %c0_0, %c0_1] : memref<4x8x8xf32, #tpu.memory_space<vmem>>, vector<4x8x8xf32>
    %c0_2 = arith.constant 0 : index
    %c0_3 = arith.constant 0 : index
    %c0_4 = arith.constant 0 : index
    %1 = vector.load %arg3[%c0_2, %c0_3, %c0_4] : memref<4x8x1xf32, #tpu.memory_space<vmem>>, vector<4x8x1xf32>
    %c0_5 = arith.constant 0 : index
    %c0_6 = arith.constant 0 : index
    %2 = vector.load %arg1[%c0_5, %c0_6] : memref<8x128xf32, #tpu.memory_space<vmem>>, vector<8x128xf32>
    %3 = vector.extract_strided_slice %0 {offsets = [0, 0, 0], sizes = [1, 8, 8], strides = [1, 1, 1]} : vector<4x8x8xf32> to vector<1x8x8xf32>
    %4 = vector.shape_cast %3 : vector<1x8x8xf32> to vector<8x8xf32>
    %cst = arith.constant dense<0.000000e+00> : vector<8x128xf32>
    %5 = tpu.matmul %4, %2, %cst {dimension_numbers = #tpu.dot_dimension_numbers<[1], [0], [0], [1], [0, 0, 1, 1], [], []>} : vector<8x8xf32>, vector<8x128xf32>, vector<8x128xf32> -> vector<8x128xf32>
    %6 = vector.extract_strided_slice %1 {offsets = [0, 0, 0], sizes = [1, 8, 1], strides = [1, 1, 1]} : vector<4x8x1xf32> to vector<1x8x1xf32>
    %7 = vector.shape_cast %6 : vector<1x8x1xf32> to vector<8x1xf32>
    %8 = vector.broadcast %7 : vector<8x1xf32> to vector<8x128xf32>
    %9 = arith.addf %5, %8 : vector<8x128xf32>
    %cst_7 = arith.constant 0.000000e+00 : f32
    %10 = vector.broadcast %cst_7 : f32 to vector<8x128xf32>
    %11 = arith.maximumf %9, %10 : vector<8x128xf32>
    %12 = vector.extract_strided_slice %0 {offsets = [1, 0, 0], sizes = [1, 8, 8], strides = [1, 1, 1]} : vector<4x8x8xf32> to vector<1x8x8xf32>
    %13 = vector.shape_cast %12 : vector<1x8x8xf32> to vector<8x8xf32>
    %cst_8 = arith.constant dense<0.000000e+00> : vector<8x128xf32>
    %14 = tpu.matmul %13, %11, %cst_8 {dimension_numbers = #tpu.dot_dimension_numbers<[1], [0], [0], [1], [0, 0, 1, 1], [], []>} : vector<8x8xf32>, vector<8x128xf32>, vector<8x128xf32> -> vector<8x128xf32>
    %15 = vector.extract_strided_slice %1 {offsets = [1, 0, 0], sizes = [1, 8, 1], strides = [1, 1, 1]} : vector<4x8x1xf32> to vector<1x8x1xf32>
    %16 = vector.shape_cast %15 : vector<1x8x1xf32> to vector<8x1xf32>
    %17 = vector.broadcast %16 : vector<8x1xf32> to vector<8x128xf32>
    %18 = arith.addf %14, %17 : vector<8x128xf32>
    %cst_9 = arith.constant 0.000000e+00 : f32
    %19 = vector.broadcast %cst_9 : f32 to vector<8x128xf32>
    %20 = arith.maximumf %18, %19 : vector<8x128xf32>
    %21 = vector.extract_strided_slice %0 {offsets = [2, 0, 0], sizes = [1, 8, 8], strides = [1, 1, 1]} : vector<4x8x8xf32> to vector<1x8x8xf32>
    %22 = vector.shape_cast %21 : vector<1x8x8xf32> to vector<8x8xf32>
    %cst_10 = arith.constant dense<0.000000e+00> : vector<8x128xf32>
    %23 = tpu.matmul %22, %20, %cst_10 {dimension_numbers = #tpu.dot_dimension_numbers<[1], [0], [0], [1], [0, 0, 1, 1], [], []>} : vector<8x8xf32>, vector<8x128xf32>, vector<8x128xf32> -> vector<8x128xf32>
    %24 = vector.extract_strided_slice %1 {offsets = [2, 0, 0], sizes = [1, 8, 1], strides = [1, 1, 1]} : vector<4x8x1xf32> to vector<1x8x1xf32>
    %25 = vector.shape_cast %24 : vector<1x8x1xf32> to vector<8x1xf32>
    %26 = vector.broadcast %25 : vector<8x1xf32> to vector<8x128xf32>
    %27 = arith.addf %23, %26 : vector<8x128xf32>
    %cst_11 = arith.constant 0.000000e+00 : f32
    %28 = vector.broadcast %cst_11 : f32 to vector<8x128xf32>
    %29 = arith.maximumf %27, %28 : vector<8x128xf32>
    %30 = vector.extract_strided_slice %0 {offsets = [3, 0, 0], sizes = [1, 8, 8], strides = [1, 1, 1]} : vector<4x8x8xf32> to vector<1x8x8xf32>
    %31 = vector.shape_cast %30 : vector<1x8x8xf32> to vector<8x8xf32>
    %cst_12 = arith.constant dense<0.000000e+00> : vector<8x128xf32>
    %32 = tpu.matmul %31, %29, %cst_12 {dimension_numbers = #tpu.dot_dimension_numbers<[1], [0], [0], [1], [0, 0, 1, 1], [], []>} : vector<8x8xf32>, vector<8x128xf32>, vector<8x128xf32> -> vector<8x128xf32>
    %33 = vector.extract_strided_slice %1 {offsets = [3, 0, 0], sizes = [1, 8, 1], strides = [1, 1, 1]} : vector<4x8x1xf32> to vector<1x8x1xf32>
    %34 = vector.shape_cast %33 : vector<1x8x1xf32> to vector<8x1xf32>
    %35 = vector.broadcast %34 : vector<8x1xf32> to vector<8x128xf32>
    %36 = arith.addf %32, %35 : vector<8x128xf32>
    %c0_13 = arith.constant 0 : index
    %c0_14 = arith.constant 0 : index
    %37 = vector.load %arg4[%c0_13, %c0_14] : memref<8x128xf32, #tpu.memory_space<vmem>>, vector<8x128xf32>
    tpu.vector_store %arg4[%c0_13, %c0_14], %36 {strides = array<i32>} : memref<8x128xf32, #tpu.memory_space<vmem>>, vector<8x128xf32>,
    return
  }
  func.func @transform_0(%arg0: i32) -> (i32, i32) {
    %c0_i32 = arith.constant 0 : i32
    %c0_i32_0 = arith.constant 0 : i32
    return %c0_i32, %arg0 : i32, i32
  }
  func.func @transform_1(%arg0: i32) -> (i32, i32, i32) {
    %c0_i32 = arith.constant 0 : i32
    %c0_i32_0 = arith.constant 0 : i32
    %c0_i32_1 = arith.constant 0 : i32
    %c0_i32_2 = arith.constant 0 : i32
    return %c0_i32, %c0_i32_0, %c0_i32_1 : i32, i32, i32
  }
  func.func @transform_2(%arg0: i32) -> (i32, i32, i32) {
    %c0_i32 = arith.constant 0 : i32
    %c0_i32_0 = arith.constant 0 : i32
    %c0_i32_1 = arith.constant 0 : i32
    %c0_i32_2 = arith.constant 0 : i32
    return %c0_i32, %c0_i32_0, %c0_i32_1 : i32, i32, i32
  }
  func.func @transform_3(%arg0: i32) -> (i32, i32) {
    %c0_i32 = arith.constant 0 : i32
    %c0_i32_0 = arith.constant 0 : i32
    return %c0_i32, %arg0 : i32, i32
  }
}

</mosaic_0001>

<llo_original>
// kernel: mlp_forward.1
$region0: #{mlp_forward.1}
  #allocation0 [shape = 'u32[]', space=smem, size = 0x4, offset = 0x4, fixed_abs, tag = 'smem constant byte address 0x4 - core index']
  #allocation1 [shape = 'u32[72,128]{1,0:T(1,128)}', space=vmem, size = 0x9000, scoped, tag = 'internal scratch']
  %s0 = inlined_call_operand.vmem [shape: f32[8,128], index: 0, kind: input, shape index: {}]
  %s1 = inlined_call_operand.vmem [shape: f32[4,8,8], index: 1, kind: input, shape index: {}]
  %s2 = inlined_call_operand.vmem [shape: f32[4,8,1], index: 2, kind: input, shape index: {}]
  %s3 = inlined_call_operand.vmem [shape: f32[8,128], index: 3, kind: output, shape index: {}]
  %s4 = sld [smem:[#allocation0]]
  $region22: #{mlp_forward.1} parent=0
    _
  %s6 = ssub.s32 1, %s4
  %s7 = scalar_select 0, %s6, %s4
  // Predicated region
  $region2: #{mlp_forward.1} parent=0 // pred_check
    _
  $region3: #{mlp_forward.1} parent=0 // pred_check_branch
    %9 = sbr.rel (0) target = $region5
  $region4: #{mlp_forward.1} parent=0 // pred_region
    _
  $region5: #{mlp_forward.1} parent=0 // pred_fallthru
    _
  // Predicated region
  $region6: #{mlp_forward.1} parent=0 // pred_check
    _
  $region7: #{mlp_forward.1} parent=0 // pred_check_branch
    %11 = sbr.rel (0) target = $region9
  $region8: #{mlp_forward.1} parent=0 // pred_region
    _
  $region9: #{mlp_forward.1} parent=0 // pred_fallthru
    _
  // Predicated region
  $region10: #{mlp_forward.1} parent=0 // pred_check
    _
  $region11: #{mlp_forward.1} parent=0 // pred_check_branch
    %13 = sbr.rel (0) target = $region13
  $region12: #{mlp_forward.1} parent=0 // pred_region
    _
  $region13: #{mlp_forward.1} parent=0 // pred_fallthru
    _
  %v14 = vld [vmem:[%s1] sm:$0xff]
  %v15 = vld [vmem:[%s1 + $0x8] sm:$0xff]
  %v16 = vld [vmem:[%s1 + $0x10] sm:$0xff]
  %v17 = vld [vmem:[%s1 + $0x18] sm:$0xff]
  %v18 = vld [vmem:[%s2] sm:$0xff]
  %v19 = vld [vmem:[%s2 + $0x8] sm:$0xff]
  %v20 = vld [vmem:[%s2 + $0x10] sm:$0xff]
  %v21 = vld [vmem:[%s2 + $0x18] sm:$0xff]
  %v22 = vld [vmem:[%s0] sm:$0xff]
  %24 = vset.pattern.permute.xlu0 0
  %25 = vperm.xlu0 %24, %v18
  %v26 = vpop.permute.xlu0 %25
  %vm28 = vcmask 64512
  %v30 = vsel %vm28, %v14, 0
  %32 = vmatpush.msra.mxu0 0.0
  %33 = vmatpush.msra.mxu0 0.0
  %34 = vmatpush.msra.mxu0 0.0
  %35 = vmatpush.msra.mxu0 0.0
  %36 = vmatpush.msra.mxu0 0.0
  %37 = vmatpush.msra.mxu0 0.0
  %38 = vmatpush.msra.mxu0 0.0
  %39 = vmatpush.msra.mxu0 0.0
  %40 = vmatpush.msra.mxu0 0.0
  %41 = vmatpush.msra.mxu0 0.0
  %42 = vmatpush.msra.mxu0 0.0
  %43 = vmatpush.msra.mxu0 0.0
  %44 = vmatpush.msra.mxu0 0.0
  %45 = vmatpush.msra.mxu0 0.0
  %46 = vmatpush.msra.mxu0 0.0
  %47 = vmatpush.msra.mxu0 %v22
  %48 = vmatmul.f32.gmra.mxu0 %v30
  %v49 = vpop.f32.mrf.mxu0
  %v50 = vadd.f32 %v26, %v49
  %51 = vdwg.mxu0
  %v52 = vmax.f32 %v50, 0.0
  %54 = vset.pattern.permute.xlu0 0
  %55 = vperm.xlu0 %54, %v19
  %v56 = vpop.permute.xlu0 %55
  %v59 = vsel %vm28, %v15, 0
  %61 = vmatpush.msra.mxu0 0.0
  %62 = vmatpush.msra.mxu0 0.0
  %63 = vmatpush.msra.mxu0 0.0
  %64 = vmatpush.msra.mxu0 0.0
  %65 = vmatpush.msra.mxu0 0.0
  %66 = vmatpush.msra.mxu0 0.0
  %67 = vmatpush.msra.mxu0 0.0
  %68 = vmatpush.msra.mxu0 0.0
  %69 = vmatpush.msra.mxu0 0.0
  %70 = vmatpush.msra.mxu0 0.0
  %71 = vmatpush.msra.mxu0 0.0
  %72 = vmatpush.msra.mxu0 0.0
  %73 = vmatpush.msra.mxu0 0.0
  %74 = vmatpush.msra.mxu0 0.0
  %75 = vmatpush.msra.mxu0 0.0
  %76 = vmatpush.msra.mxu0 %v52
  %77 = vmatmul.f32.gmra.mxu0 %v59
  %v78 = vpop.f32.mrf.mxu0
  %v79 = vadd.f32 %v56, %v78
  %80 = vdwg.mxu0
  %v81 = vmax.f32 %v79, 0.0
  %83 = vset.pattern.permute.xlu0 0
  %84 = vperm.xlu0 %83, %v20
  %v85 = vpop.permute.xlu0 %84
  %v88 = vsel %vm28, %v16, 0
  %90 = vmatpush.msra.mxu0 0.0
  %91 = vmatpush.msra.mxu0 0.0
  %92 = vmatpush.msra.mxu0 0.0
  %93 = vmatpush.msra.mxu0 0.0
  %94 = vmatpush.msra.mxu0 0.0
  %95 = vmatpush.msra.mxu0 0.0
  %96 = vmatpush.msra.mxu0 0.0
  %97 = vmatpush.msra.mxu0 0.0
  %98 = vmatpush.msra.mxu0 0.0
  %99 = vmatpush.msra.mxu0 0.0
  %100 = vmatpush.msra.mxu0 0.0
  %101 = vmatpush.msra.mxu0 0.0
  %102 = vmatpush.msra.mxu0 0.0
  %103 = vmatpush.msra.mxu0 0.0
  %104 = vmatpush.msra.mxu0 0.0
  %105 = vmatpush.msra.mxu0 %v81
  %106 = vmatmul.f32.gmra.mxu0 %v88
  %v107 = vpop.f32.mrf.mxu0
  %v108 = vadd.f32 %v85, %v107
  %109 = vdwg.mxu0
  %v110 = vmax.f32 %v108, 0.0
  %112 = vset.pattern.permute.xlu0 0
  %113 = vperm.xlu0 %112, %v21
  %v114 = vpop.permute.xlu0 %113
  %v117 = vsel %vm28, %v17, 0
  %119 = vmatpush.msra.mxu0 0.0
  %120 = vmatpush.msra.mxu0 0.0
  %121 = vmatpush.msra.mxu0 0.0
  %122 = vmatpush.msra.mxu0 0.0
  %123 = vmatpush.msra.mxu0 0.0
  %124 = vmatpush.msra.mxu0 0.0
  %125 = vmatpush.msra.mxu0 0.0
  %126 = vmatpush.msra.mxu0 0.0
  %127 = vmatpush.msra.mxu0 0.0
  %128 = vmatpush.msra.mxu0 0.0
  %129 = vmatpush.msra.mxu0 0.0
  %130 = vmatpush.msra.mxu0 0.0
  %131 = vmatpush.msra.mxu0 0.0
  %132 = vmatpush.msra.mxu0 0.0
  %133 = vmatpush.msra.mxu0 0.0
  %134 = vmatpush.msra.mxu0 %v110
  %135 = vmatmul.f32.gmra.mxu0 %v117
  %v136 = vpop.f32.mrf.mxu0
  %v137 = vadd.f32 %v114, %v136
  %138 = vdwg.mxu0
  %139 = vst [vmem:[%s3] sm:$0xff] %v137
  // Predicated region
  $region14: #{mlp_forward.1} parent=0 // pred_check
    _
  $region15: #{mlp_forward.1} parent=0 // pred_check_branch
    %141 = sbr.rel (0) target = $region17
  $region16: #{mlp_forward.1} parent=0 // pred_region
    _
  $region17: #{mlp_forward.1} parent=0 // pred_fallthru
    _
  // Predicated region
  $region18: #{mlp_forward.1} parent=0 // pred_check
    _
  $region19: #{mlp_forward.1} parent=0 // pred_check_branch
    %143 = sbr.rel (0) target = $region21
  $region20: #{mlp_forward.1} parent=0 // pred_region
    _
  $region21: #{mlp_forward.1} parent=0 // pred_fallthru
    _

</llo_original>
